<compile_context>
chip_gen: v6e
topology: v6e:2x2x1
jax: 0.10.0
libtpu: 0.0.40
codegen_flags: <defaults>
</compile_context>

<pallas_src>
import functools

import jax
import jax.numpy as jnp
from jax import lax
from jax.experimental import pallas as pl
from jax.experimental.pallas import tpu as pltpu

LANE = 128


def _round_up(x, m):
    return ((x + m - 1) // m) * m


def _pick_tile(n, candidates):
    """Largest candidate dividing n that still leaves >= 2 grid steps (so a
    'parallel' axis can split across v7x's two TensorCores); otherwise the
    largest dividing candidate; otherwise n itself."""
    fallback = None
    for t in candidates:
        if n % t == 0:
            if fallback is None:
                fallback = t
            if n // t >= 2:
                return t
    return fallback if fallback is not None else n


def _vmem_limit_bytes():
    # Generation-aware scoped-VMEM limit: ~3/4 of physical (96 MiB on v5e/v6e,
    # 48 MiB on v7x), falling back to 64 MiB if the query is unavailable.
    try:
        cap = int(pltpu.get_tpu_info().vmem_capacity_bytes)
        return min((cap * 3) // 4, 100 * 1024 * 1024)
    except Exception:
        return 64 * 1024 * 1024


# ---------------------------------------------------------------------------
# Kernel 1: per-node projection + fused attention scores (tiled over rows).
# ---------------------------------------------------------------------------
def _gat_project_kernel(feat_ref, w_ref, alt_ref, ar_ref, z_ref, er_ref, elt_ref):
    feat = feat_ref[...].astype(jnp.bfloat16)
    # Linear projection of all heads at once (bf16 MXU, f32 accumulation).
    z = jnp.dot(feat, w_ref[...], preferred_element_type=jnp.float32)   # (tm, hf_pad)
    z_bf = z.astype(jnp.bfloat16)
    z_ref[...] = z_bf
    # er[m, h] = <z[m, head h cols], attn_r[h]> for all heads via block-diag matmul.
    er_ref[...] = jnp.dot(z_bf, ar_ref[...], preferred_element_type=jnp.float32)
    # el stored transposed (H, tm) so phase 2 reads it as a sublane slice.
    elt_ref[...] = lax.dot_general(alt_ref[...], z_bf, (((1,), (1,)), ((), ())),
                                   preferred_element_type=jnp.float32)


# ---------------------------------------------------------------------------
# Kernel 2: blocked online edge-softmax + aggregation.
#   grid = (dst_blocks [parallel], src_blocks [arbitrary])
#   scratch: per-head running max / denom, (t_dst, hf_pad) output accumulator.
#   Empty (dst, src) adjacency blocks (scalar-prefetched nnz table) skip all work.
# ---------------------------------------------------------------------------
def _gat_attend_kernel(nnz_ref, adj_ref, z_ref, er_ref, elt_ref, hmask_ref,
                       out_ref, m_sc, l_sc, acc_sc, *, num_heads, apply_elu):
    i = pl.program_id(0)
    j = pl.program_id(1)
    n_src_blk = pl.num_programs(1)

    @pl.when(j == 0)
    def _():
        m_sc[...] = jnp.full_like(m_sc, -jnp.inf)
        l_sc[...] = jnp.zeros_like(l_sc)
        acc_sc[...] = jnp.zeros_like(acc_sc)

    @pl.when(nnz_ref[i * n_src_blk + j] > 0)      # skip fully-empty blocks
    def _():
        # Adjacency mask as an additive bias, hoisted out of the head loop.
        bias = jnp.where(adj_ref[...] > 0, jnp.float32(0.0), jnp.float32(-1e30))
        z = z_ref[...]                            # (t_src, hf_pad) bf16
        for h in range(num_heads):                # static, small H
            e = er_ref[:, h:h + 1] + elt_ref[h:h + 1, :]      # (t_dst, t_src)
            e = jnp.maximum(e, 0.2 * e) + bias                # leaky_relu(0.2) + mask
            m_prev = m_sc[h]                                  # (t_dst, 1)
            m_new = jnp.maximum(m_prev, jnp.max(e, axis=-1, keepdims=True))
            a = jnp.exp(m_prev - m_new)                       # online-softmax rescale
            p = jnp.exp(e - m_new)                            # masked entries underflow
            l_sc[h] = a * l_sc[h] + jnp.sum(p, axis=-1, keepdims=True)
            m_sc[h] = m_new
            contrib = jnp.dot(p.astype(jnp.bfloat16), z,
                              preferred_element_type=jnp.float32)   # (t_dst, hf_pad)
            hmask = hmask_ref[h:h + 1, :]                     # (1, hf_pad) head lanes
            acc_sc[...] = (acc_sc[...] * jnp.where(hmask > 0, a, jnp.float32(1.0))
                           + contrib * hmask)

    @pl.when(j == n_src_blk - 1)
    def _():
        acc = acc_sc[...]
        inv_scale = jnp.zeros_like(acc)
        for h in range(num_heads):
            inv = pl.reciprocal(jnp.maximum(l_sc[h], jnp.float32(1e-20)), approx=True)
            inv_scale = inv_scale + inv * hmask_ref[h:h + 1, :]
        out = acc * inv_scale
        if apply_elu:
            out = jnp.where(out > 0, out, jnp.exp(jnp.minimum(out, 0.0)) - 1.0)
        out_ref[...] = out                        # single lane-dense store


# ---------------------------------------------------------------------------
# Wrapper: one GATConv layer.
# ---------------------------------------------------------------------------
def _block_diag_attn(attn, num_heads, out_feats, hf_pad):
    # (H, F) -> block-diagonal (hf_pad, H): column h holds attn[h] in rows
    # h*F .. h*F+F, zeros elsewhere (including the single lane padding).
    eye = jnp.eye(num_heads, dtype=attn.dtype)
    blk = (attn[:, :, None] * eye[:, None, :]).reshape(num_heads * out_feats, num_heads)
    return jnp.pad(blk, ((0, hf_pad - num_heads * out_feats), (0, 0)))


def _head_mask(num_heads, out_feats, hf_pad):
    ids = jnp.arange(hf_pad)
    own = ids // out_feats
    valid = ids < num_heads * out_feats
    m = (own[None, :] == jnp.arange(num_heads)[:, None]) & valid[None, :]
    return m.astype(jnp.float32)                  # (H, hf_pad)


def gat_conv(adj, feat, w, attn_l, attn_r, *, num_heads, out_feats, apply_elu):
    """One GATConv layer.  Returns (N, num_heads * out_feats) float32."""
    n, f_in = feat.shape
    hf = num_heads * out_feats
    hf_pad = _round_up(hf, LANE)                  # single lane-padding of H*F
    n_pad = _round_up(n, LANE)

    t_proj = _pick_tile(n_pad, (256, 128))        # MXU-deep projection tile
    t_dst = 128 if n_pad >= 128 else n_pad        # destination-row tile
    t_src = _pick_tile(n_pad, (512, 256, 128))    # source-axis tile
    n_dst_blk = n_pad // t_dst
    n_src_blk = n_pad // t_src

    # Host-side packing (plain XLA ops).
    feat_p = feat if n_pad == n else jnp.pad(feat, ((0, n_pad - n), (0, 0)))
    adj_b = adj > 0
    if n_pad != n:
        adj_b = jnp.pad(adj_b, ((0, n_pad - n), (0, n_pad - n)))
    adj_i8 = adj_b.astype(jnp.int8)               # 1 byte / edge flag
    nnz = adj_b.astype(jnp.int32).reshape(n_dst_blk, t_dst, n_src_blk, t_src)
    nnz = nnz.sum(axis=(1, 3)).reshape(-1).astype(jnp.int32)

    w_pad = jnp.pad(w, ((0, 0), (0, hf_pad - hf))).astype(jnp.bfloat16)
    a_r = _block_diag_attn(attn_r, num_heads, out_feats, hf_pad).astype(jnp.bfloat16)
    a_l_t = _block_diag_attn(attn_l, num_heads, out_feats, hf_pad).T.astype(jnp.bfloat16)
    hmask = _head_mask(num_heads, out_feats, hf_pad)

    vmem_limit = _vmem_limit_bytes()
    cparams1 = pltpu.CompilerParams(dimension_semantics=("parallel",),
                                    vmem_limit_bytes=vmem_limit)
    cparams2 = pltpu.CompilerParams(dimension_semantics=("parallel", "arbitrary"),
                                    vmem_limit_bytes=vmem_limit)

    # Phase 1: projection + attention scores, tiled over node rows.
    z, er, el_t = pl.pallas_call(
        _gat_project_kernel,
        out_shape=(jax.ShapeDtypeStruct((n_pad, hf_pad), jnp.bfloat16),
                   jax.ShapeDtypeStruct((n_pad, num_heads), jnp.float32),
                   jax.ShapeDtypeStruct((num_heads, n_pad), jnp.float32)),
        grid=(n_pad // t_proj,),
        in_specs=[pl.BlockSpec((t_proj, f_in), lambda i: (i, 0)),
                  pl.BlockSpec((f_in, hf_pad), lambda i: (0, 0)),         # W resident
                  pl.BlockSpec((num_heads, hf_pad), lambda i: (0, 0)),    # attn_l^T
                  pl.BlockSpec((hf_pad, num_heads), lambda i: (0, 0))],   # attn_r
        out_specs=(pl.BlockSpec((t_proj, hf_pad), lambda i: (i, 0)),
                   pl.BlockSpec((t_proj, num_heads), lambda i: (i, 0)),
                   pl.BlockSpec((num_heads, t_proj), lambda i: (0, i))),
        compiler_params=cparams1,
    )(feat_p, w_pad, a_l_t, a_r)

    # Phase 2: blocked online edge-softmax + aggregation.
    kernel = functools.partial(_gat_attend_kernel, num_heads=num_heads,
                               apply_elu=apply_elu)
    out_pad = pl.pallas_call(
        kernel,
        out_shape=jax.ShapeDtypeStruct((n_pad, hf_pad), jnp.float32),
        grid_spec=pltpu.PrefetchScalarGridSpec(
            num_scalar_prefetch=1,
            grid=(n_dst_blk, n_src_blk),
            in_specs=[
                pl.BlockSpec((t_dst, t_src), lambda i, j, nnz: (i, j)),     # adj int8
                pl.BlockSpec((t_src, hf_pad), lambda i, j, nnz: (j, 0)),    # z src tile
                pl.BlockSpec((t_dst, num_heads), lambda i, j, nnz: (i, 0)), # er dst tile
                pl.BlockSpec((num_heads, t_src), lambda i, j, nnz: (0, j)), # el^T src tile
                pl.BlockSpec((num_heads, hf_pad), lambda i, j, nnz: (0, 0)),# head mask
            ],
            out_specs=pl.BlockSpec((t_dst, hf_pad), lambda i, j, nnz: (i, 0)),
            scratch_shapes=[
                pltpu.VMEM((num_heads, t_dst, 1), jnp.float32),   # running max
                pltpu.VMEM((num_heads, t_dst, 1), jnp.float32),   # running denom
                pltpu.VMEM((t_dst, hf_pad), jnp.float32),         # output accumulator
            ],
        ),
        compiler_params=cparams2,
    )(nnz, adj_i8, z, er, el_t, hmask)

    # Drop node/lane padding outside the kernel (plain XLA slice).
    return out_pad[:n, :hf]


# ---------------------------------------------------------------------------
# Model: parameter init + forward (mirrors the PyTorch GAT module semantics).
# ---------------------------------------------------------------------------
def init_gat_params(key, in_feats, hidden_units, heads, num_classes):
    if not isinstance(hidden_units, list):
        hidden_units = [hidden_units]
    hidden_units = [in_feats] + hidden_units
    if not isinstance(heads, list):
        heads = [heads]
    heads = list(heads) + [1]
    assert len(heads) == len(hidden_units)

    dims = []
    for i in range(len(hidden_units) - 1):
        d_in = hidden_units[i] if i == 0 else hidden_units[i] * heads[i - 1]
        dims.append((d_in, hidden_units[i + 1], heads[i], True))   # elu
    if num_classes:
        dims.append((hidden_units[-1] * heads[-2], num_classes, heads[-1], False))

    layers = []
    for (d_in, d_out, h, use_elu) in dims:
        key, k_w, k_l, k_r = jax.random.split(key, 4)
        scale = (2.0 / (d_in + d_out)) ** 0.5
        layers.append(dict(
            w=jax.random.normal(k_w, (d_in, h * d_out), jnp.float32) * scale,
            attn_l=jax.random.normal(k_l, (h, d_out), jnp.float32) * scale,
            attn_r=jax.random.normal(k_r, (h, d_out), jnp.float32) * scale,
            H=h, F=d_out, elu=use_elu))
    return layers


def gat_forward(adj, x, layers):
    h = x
    n_layers = len(layers)
    for i, layer in enumerate(layers):
        out = gat_conv(adj, h, layer['w'], layer['attn_l'], layer['attn_r'],
                       num_heads=layer['H'], out_feats=layer['F'],
                       apply_elu=layer['elu'])
        if i == n_layers - 1:
            out = out.reshape(out.shape[0], layer['H'], layer['F']).mean(axis=1)
        # else: heads already concatenated along the feature dim (flatten(1))
        h = out
    return h


# ---------------------------------------------------------------------------
# Pure-JAX reference (same math incl. bf16 MXU casts) for a sanity check.
# NOTE: masking relies on every dst node having >=1 in-edge (self-loops added).
# ---------------------------------------------------------------------------
def _gat_conv_ref(adj, feat, w, al, ar, num_heads, out_feats, apply_elu):
    n = feat.shape[0]
    z = jnp.dot(feat.astype(jnp.bfloat16), w.astype(jnp.bfloat16),
                preferred_element_type=jnp.float32)
    z3 = z.astype(jnp.bfloat16).reshape(n, num_heads, out_feats)
    al_bf = al.astype(jnp.bfloat16)
    ar_bf = ar.astype(jnp.bfloat16)
    el = jnp.einsum('nhf,hf->nh', z3, al_bf, preferred_element_type=jnp.float32)
    er = jnp.einsum('nhf,hf->nh', z3, ar_bf, preferred_element_type=jnp.float32)
    e = er[:, None, :] + el[None, :, :]          # (dst, src, head)
    e = jnp.maximum(e, 0.2 * e)
    mask = adj[:, :, None] > 0
    e = jnp.where(mask, e, jnp.float32(-1e30))
    m = e.max(axis=1, keepdims=True)
    p = jnp.where(mask, jnp.exp(e - m), 0.0)
    alpha = (p / p.sum(axis=1, keepdims=True)).astype(jnp.bfloat16)
    rst = jnp.einsum('vuh,uhf->vhf', alpha, z3, preferred_element_type=jnp.float32)
    if apply_elu:
        rst = jnp.where(rst > 0, rst, jnp.exp(jnp.minimum(rst, 0.0)) - 1.0)
    return rst.reshape(n, num_heads * out_feats)


def _gat_forward_ref(adj, x, layers):
    h = x
    n_layers = len(layers)
    for i, layer in enumerate(layers):
        out = _gat_conv_ref(adj, h, layer['w'], layer['attn_l'], layer['attn_r'],
                            layer['H'], layer['F'], layer['elu'])
        if i == n_layers - 1:
            out = out.reshape(out.shape[0], layer['H'], layer['F']).mean(axis=1)
        h = out
    return h


if __name__ == "__main__":
    key = jax.random.PRNGKey(0)
    N, IN_FEATS, HIDDEN, HEADS, NUM_CLASSES = 256, 16, 8, 4, 8

    k_adj, k_x, k_p = jax.random.split(key, 3)
    # Random sparse-ish directed graph + self loops (guarantees >=1 in-edge).
    adj = (jax.random.uniform(k_adj, (N, N)) < 0.05).astype(jnp.float32)
    adj = jnp.maximum(adj, jnp.eye(N, dtype=jnp.float32))
    x = jax.random.normal(k_x, (N, IN_FEATS), jnp.float32)

    layers = init_gat_params(k_p, IN_FEATS, HIDDEN, HEADS, NUM_CLASSES)

    out = gat_forward(adj, x, layers)
    out = jax.block_until_ready(out)
    assert out.shape == (N, NUM_CLASSES), out.shape

    ref = jax.block_until_ready(_gat_forward_ref(adj, x, layers))
    max_err = float(jnp.max(jnp.abs(out - ref)))
    assert jnp.allclose(out, ref, rtol=2e-2, atol=2e-2), max_err

    print("KERNEL_OK")
</pallas_src>

<mosaic_0001>
module attributes {stable_mosaic.version = 11 : i64} {
  func.func @_gat_project_kernel(%arg0: i32, %arg1: memref<128x16xf32, #tpu.memory_space<vmem>>, %arg2: memref<16x128xbf16, #tpu.memory_space<vmem>>, %arg3: memref<4x128xbf16, #tpu.memory_space<vmem>>, %arg4: memref<128x4xbf16, #tpu.memory_space<vmem>>, %arg5: memref<128x128xbf16, #tpu.memory_space<vmem>>, %arg6: memref<128x4xf32, #tpu.memory_space<vmem>>, %arg7: memref<4x128xf32, #tpu.memory_space<vmem>>) attributes {dimension_semantics = [#tpu.dimension_semantics<parallel>], iteration_bounds = array<i64: 2>, scalar_prefetch = 0 : i64, scratch_operands = 0 : i64, tpu.core_type = #tpu.core_type<tc>, window_params = [{transform_indices = @transform_0, window_bounds = array<i64: 128, 16>}, {pipeline_mode = #tpu.pipeline_mode<synchronous>, transform_indices = @transform_1, window_bounds = array<i64: 16, 128>}, {pipeline_mode = #tpu.pipeline_mode<synchronous>, transform_indices = @transform_2, window_bounds = array<i64: 4, 128>}, {pipeline_mode = #tpu.pipeline_mode<synchronous>, transform_indices = @transform_3, window_bounds = array<i64: 128, 4>}, {transform_indices = @transform_4, window_bounds = array<i64: 128, 128>}, {transform_indices = @transform_5, window_bounds = array<i64: 128, 4>}, {transform_indices = @transform_6, window_bounds = array<i64: 4, 128>}]} {
    %c0 = arith.constant 0 : index
    %c0_0 = arith.constant 0 : index
    %0 = vector.load %arg1[%c0, %c0_0] : memref<128x16xf32, #tpu.memory_space<vmem>>, vector<128x16xf32>
    %1 = arith.truncf %0 : vector<128x16xf32> to vector<128x16xbf16>
    %c0_1 = arith.constant 0 : index
    %c0_2 = arith.constant 0 : index
    %2 = vector.load %arg2[%c0_1, %c0_2] : memref<16x128xbf16, #tpu.memory_space<vmem>>, vector<16x128xbf16>
    %cst = arith.constant dense<0.000000e+00> : vector<128x128xf32>
    %3 = tpu.matmul %1, %2, %cst {dimension_numbers = #tpu.dot_dimension_numbers<[1], [0], [0], [1], [0, 0, 1, 1], [], []>} : vector<128x16xbf16>, vector<16x128xbf16>, vector<128x128xf32> -> vector<128x128xf32>
    %4 = arith.truncf %3 : vector<128x128xf32> to vector<128x128xbf16>
    %c0_3 = arith.constant 0 : index
    %c0_4 = arith.constant 0 : index
    %5 = vector.load %arg5[%c0_3, %c0_4] : memref<128x128xbf16, #tpu.memory_space<vmem>>, vector<128x128xbf16>
    tpu.vector_store %arg5[%c0_3, %c0_4], %4 {strides = array<i32>} : memref<128x128xbf16, #tpu.memory_space<vmem>>, vector<128x128xbf16>,
    %c0_5 = arith.constant 0 : index
    %c0_6 = arith.constant 0 : index
    %6 = vector.load %arg4[%c0_5, %c0_6] : memref<128x4xbf16, #tpu.memory_space<vmem>>, vector<128x4xbf16>
    %cst_7 = arith.constant dense<0.000000e+00> : vector<128x4xf32>
    %7 = tpu.matmul %4, %6, %cst_7 {dimension_numbers = #tpu.dot_dimension_numbers<[1], [0], [0], [1], [0, 0, 1, 1], [], []>} : vector<128x128xbf16>, vector<128x4xbf16>, vector<128x4xf32> -> vector<128x4xf32>
    %c0_8 = arith.constant 0 : index
    %c0_9 = arith.constant 0 : index
    %8 = vector.load %arg6[%c0_8, %c0_9] : memref<128x4xf32, #tpu.memory_space<vmem>>, vector<128x4xf32>
    tpu.vector_store %arg6[%c0_8, %c0_9], %7 {strides = array<i32>} : memref<128x4xf32, #tpu.memory_space<vmem>>, vector<128x4xf32>,
    %c0_10 = arith.constant 0 : index
    %c0_11 = arith.constant 0 : index
    %9 = vector.load %arg3[%c0_10, %c0_11] : memref<4x128xbf16, #tpu.memory_space<vmem>>, vector<4x128xbf16>
    %cst_12 = arith.constant dense<0.000000e+00> : vector<4x128xf32>
    %10 = tpu.matmul %9, %4, %cst_12 {dimension_numbers = #tpu.dot_dimension_numbers<[1], [1], [0], [0], [0, 0, 1, 0], [], []>} : vector<4x128xbf16>, vector<128x128xbf16>, vector<4x128xf32> -> vector<4x128xf32>
    %c0_13 = arith.constant 0 : index
    %c0_14 = arith.constant 0 : index
    %11 = vector.load %arg7[%c0_13, %c0_14] : memref<4x128xf32, #tpu.memory_space<vmem>>, vector<4x128xf32>
    tpu.vector_store %arg7[%c0_13, %c0_14], %10 {strides = array<i32>} : memref<4x128xf32, #tpu.memory_space<vmem>>, vector<4x128xf32>,
    return
  }
  func.func @transform_0(%arg0: i32) -> (i32, i32) {
    %c0_i32 = arith.constant 0 : i32
    %c0_i32_0 = arith.constant 0 : i32
    return %arg0, %c0_i32 : i32, i32
  }
  func.func @transform_1(%arg0: i32) -> (i32, i32) {
    %c0_i32 = arith.constant 0 : i32
    %c0_i32_0 = arith.constant 0 : i32
    %c0_i32_1 = arith.constant 0 : i32
    return %c0_i32, %c0_i32_0 : i32, i32
  }
  func.func @transform_2(%arg0: i32) -> (i32, i32) {
    %c0_i32 = arith.constant 0 : i32
    %c0_i32_0 = arith.constant 0 : i32
    %c0_i32_1 = arith.constant 0 : i32
    return %c0_i32, %c0_i32_0 : i32, i32
  }
  func.func @transform_3(%arg0: i32) -> (i32, i32) {
    %c0_i32 = arith.constant 0 : i32
    %c0_i32_0 = arith.constant 0 : i32
    %c0_i32_1 = arith.constant 0 : i32
    return %c0_i32, %c0_i32_0 : i32, i32
  }
  func.func @transform_4(%arg0: i32) -> (i32, i32) {
    %c0_i32 = arith.constant 0 : i32
    %c0_i32_0 = arith.constant 0 : i32
    return %arg0, %c0_i32 : i32, i32
  }
  func.func @transform_5(%arg0: i32) -> (i32, i32) {
    %c0_i32 = arith.constant 0 : i32
    %c0_i32_0 = arith.constant 0 : i32
    return %arg0, %c0_i32 : i32, i32
  }
  func.func @transform_6(%arg0: i32) -> (i32, i32) {
    %c0_i32 = arith.constant 0 : i32
    %c0_i32_0 = arith.constant 0 : i32
    return %c0_i32, %arg0 : i32, i32
  }
}

</mosaic_0001>

<llo_original>
// kernel: tpu_custom_call.1
$region0: #{tpu_custom_call.1}
  #allocation0 [shape = 'u32[]', space=smem, size = 0x4, offset = 0x4, fixed_abs, tag = 'smem constant byte address 0x4 - core index']
  #allocation1 [shape = 'u32[144,128]{1,0:T(1,128)}', space=vmem, size = 0x12000, scoped, tag = 'internal scratch']
  %s0 = inlined_call_operand.vmem [shape: f32[256,16], index: 0, kind: input, shape index: {}]
  %s1 = inlined_call_operand.vmem [shape: bf16[16,128], index: 1, kind: input, shape index: {}]
  %s2 = inlined_call_operand.vmem [shape: bf16[4,128], index: 2, kind: input, shape index: {}]
  %s3 = inlined_call_operand.vmem [shape: bf16[128,4], index: 3, kind: input, shape index: {}]
  %s4 = inlined_call_operand.hbm [shape: bf16[256,128], index: 4, kind: output, shape index: {0}]
  %s5 = inlined_call_operand.vmem [shape: f32[256,4], index: 5, kind: output, shape index: {1}]
  %s6 = inlined_call_operand.hbm [shape: f32[4,256], index: 6, kind: output, shape index: {2}]
  %7 = xla_tuple %s4, %s5, %s6
  %s8 = sld [smem:[#allocation0]]
  $region65: #{tpu_custom_call.1} parent=0
    _
  %s10 = ssub.s32 1, %s8
  %s11 = scalar_select 0, %s10, %s8
  $region1: #{tpu_custom_call.1} parent=0
    #allocation2 [shape = 'u8[65536]{0}', space=vmem, size = 0x10000, scoped, tag = 'output window, operand 0']
    #allocation3 [shape = 's32[2]{0}', space=sflag, size = 0x8, scoped, tag = 'scoped memory for tpu_custom_call.1']
    #allocation4 [shape = 'u8[4096]{0}', space=vmem, size = 0x1000, scoped, tag = 'output window, operand 2']
    #allocation5 [shape = 's32[2]{0}', space=sflag, size = 0x8, scoped, tag = 'scoped memory for tpu_custom_call.1']
    %12 = vsyncpa [#allocation3], 0
    %s13 = scalar_lea.sflag [#allocation3], 1
    %14 = vsyncpa %s13, 0
    %15 = vsyncpa [#allocation5], 0
    %s16 = scalar_lea.sflag [#allocation5], 1
    %17 = vsyncpa %s16, 0
    loop: start=0, step=1, limit=4
    $region2: #{tpu_custom_call.1} parent=1 // loop_pre_header
      _
    $region3: #{tpu_custom_call.1} parent=1 // loop_header
      %s19 = sphi 0, %s23
      %p20 = scmp.ge.s32.totalorder %s19, 4
      %s29 = sphi 0, %s31
      %s32 = sphi 0, %s29
      %s33 = sphi 0, %s32
      %s49 = sphi 0, %s33
      %s53 = sphi 0, %s53
      %s55 = sphi 0, %s53
      %s56 = sphi 0, %s55
      %s70 = sphi 0, %s56
      %s74 = sphi 0, %s74
      %s76 = sphi 0, %s74
      %s77 = sphi 0, %s76
      %s91 = sphi 0, %s77
      %s95 = sphi 0, %s95
      %s97 = sphi 0, %s95
      %s98 = sphi 0, %s97
      %s112 = sphi 0, %s98
      %s118 = sphi 0, %s120
      %s121 = sphi 0, %s118
      %s122 = sphi 0, %s121
      %s138 = sphi 0, %s122
      %s144 = sphi 0, %s146
      %s147 = sphi 0, %s144
      %s148 = sphi 0, %s147
      %s164 = sphi 0, %s148
      %s170 = sphi 0, %s172
      %s173 = sphi 0, %s170
      %s174 = sphi 0, %s173
      %s190 = sphi 0, %s174
    $region4: #{tpu_custom_call.1} parent=1 // loop_header_branch
      %22 = sbr.rel (%p20) target = $region8
    $region5: #{tpu_custom_call.1} parent=1 // loop_body
      %s24 = ssub.s32 %s19, 1
      %s25 = ssub.s32 %s19, 2
      %s26 = sadd.s32 %s19, 1
      %s27 = ssub.s32 %s19, %s26
      %p28 = scmp.eq.s32.totalorder %s27, 0
      %s30 = sadd.s32 %s29, 1
      %s31 = scalar_select %p28, %s29, %s30
      %p34 = pneg %p28
      %p35 = scmp.eq.s32.totalorder %s19, 1
      %p36 = por %p34, %p35
      %p37 = scmp.ne.s32.totalorder %s29, %s32
      %p38 = scmp.eq.s32.totalorder %s19, 0
      %p39 = por %p37, %p38
      %p40 = scmp.ne.s32.totalorder %s29, %s32
      %p41 = scmp.eq.s32.totalorder %s24, 1
      %p42 = por %p40, %p41
      %p43 = scmp.ne.s32.totalorder %s32, %s33
      %p44 = scmp.eq.s32.totalorder %s24, 0
      %p45 = por %p43, %p44
      %p46 = scmp.ne.s32.totalorder %s32, %s33
      %p47 = scmp.eq.s32.totalorder %s25, 1
      %p48 = por %p46, %p47
      %p50 = scmp.ne.s32.totalorder %s33, %s49
      %p51 = scmp.eq.s32.totalorder %s25, 0
      %p52 = por %p50, %p51
      %s54 = sadd.s32 %s53, 1
      %p57 = scmp.eq.s32.totalorder %s19, 1
      %p58 = scmp.ne.s32.totalorder %s53, %s55
      %p59 = scmp.eq.s32.totalorder %s19, 0
      %p60 = por %p58, %p59
      %p61 = scmp.ne.s32.totalorder %s53, %s55
      %p62 = scmp.eq.s32.totalorder %s24, 1
      %p63 = por %p61, %p62
      %p64 = scmp.ne.s32.totalorder %s55, %s56
      %p65 = scmp.eq.s32.totalorder %s24, 0
      %p66 = por %p64, %p65
      %p67 = scmp.ne.s32.totalorder %s55, %s56
      %p68 = scmp.eq.s32.totalorder %s25, 1
      %p69 = por %p67, %p68
      %p71 = scmp.ne.s32.totalorder %s56, %s70
      %p72 = scmp.eq.s32.totalorder %s25, 0
      %p73 = por %p71, %p72
      %s75 = sadd.s32 %s74, 1
      %p78 = scmp.eq.s32.totalorder %s19, 1
      %p79 = scmp.ne.s32.totalorder %s74, %s76
      %p80 = scmp.eq.s32.totalorder %s19, 0
      %p81 = por %p79, %p80
      %p82 = scmp.ne.s32.totalorder %s74, %s76
      %p83 = scmp.eq.s32.totalorder %s24, 1
      %p84 = por %p82, %p83
      %p85 = scmp.ne.s32.totalorder %s76, %s77
      %p86 = scmp.eq.s32.totalorder %s24, 0
      %p87 = por %p85, %p86
      %p88 = scmp.ne.s32.totalorder %s76, %s77
      %p89 = scmp.eq.s32.totalorder %s25, 1
      %p90 = por %p88, %p89
      %p92 = scmp.ne.s32.totalorder %s77, %s91
      %p93 = scmp.eq.s32.totalorder %s25, 0
      %p94 = por %p92, %p93
      %s96 = sadd.s32 %s95, 1
      %p99 = scmp.eq.s32.totalorder %s19, 1
      %p100 = scmp.ne.s32.totalorder %s95, %s97
      %p101 = scmp.eq.s32.totalorder %s19, 0
      %p102 = por %p100, %p101
      %p103 = scmp.ne.s32.totalorder %s95, %s97
      %p104 = scmp.eq.s32.totalorder %s24, 1
      %p105 = por %p103, %p104
      %p106 = scmp.ne.s32.totalorder %s97, %s98
      %p107 = scmp.eq.s32.totalorder %s24, 0
      %p108 = por %p106, %p107
      %p109 = scmp.ne.s32.totalorder %s97, %s98
      %p110 = scmp.eq.s32.totalorder %s25, 1
      %p111 = por %p109, %p110
      %p113 = scmp.ne.s32.totalorder %s98, %s112
      %p114 = scmp.eq.s32.totalorder %s25, 0
      %p115 = por %p113, %p114
      %s116 = ssub.s32 %s19, %s26
      %p117 = scmp.eq.s32.totalorder %s116, 0
      %s119 = sadd.s32 %s118, 1
      %s120 = scalar_select %p117, %s118, %s119
      %p123 = pneg %p117
      %p124 = scmp.eq.s32.totalorder %s19, 1
      %p125 = por %p123, %p124
      %p126 = scmp.ne.s32.totalorder %s118, %s121
      %p127 = scmp.eq.s32.totalorder %s19, 0
      %p128 = por %p126, %p127
      %p129 = scmp.ne.s32.totalorder %s118, %s121
      %p130 = scmp.eq.s32.totalorder %s24, 1
      %p131 = por %p129, %p130
      %p132 = scmp.ne.s32.totalorder %s121, %s122
      %p133 = scmp.eq.s32.totalorder %s24, 0
      %p134 = por %p132, %p133
      %p135 = scmp.ne.s32.totalorder %s121, %s122
      %p136 = scmp.eq.s32.totalorder %s25, 1
      %p137 = por %p135, %p136
      %p139 = scmp.ne.s32.totalorder %s122, %s138
      %p140 = scmp.eq.s32.totalorder %s25, 0
      %p141 = por %p139, %p140
      %s142 = ssub.s32 %s19, %s26
      %p143 = scmp.eq.s32.totalorder %s142, 0
      %s145 = sadd.s32 %s144, 1
      %s146 = scalar_select %p143, %s144, %s145
      %p149 = pneg %p143
      %p150 = scmp.eq.s32.totalorder %s19, 1
      %p151 = por %p149, %p150
      %p152 = scmp.ne.s32.totalorder %s144, %s147
      %p153 = scmp.eq.s32.totalorder %s19, 0
      %p154 = por %p152, %p153
      %p155 = scmp.ne.s32.totalorder %s144, %s147
      %p156 = scmp.eq.s32.totalorder %s24, 1
      %p157 = por %p155, %p156
      %p158 = scmp.ne.s32.totalorder %s147, %s148
      %p159 = scmp.eq.s32.totalorder %s24, 0
      %p160 = por %p158, %p159
      %p161 = scmp.ne.s32.totalorder %s147, %s148
      %p162 = scmp.eq.s32.totalorder %s25, 1
      %p163 = por %p161, %p162
      %p165 = scmp.ne.s32.totalorder %s148, %s164
      %p166 = scmp.eq.s32.totalorder %s25, 0
      %p167 = por %p165, %p166
      %s168 = ssub.s32 %s19, %s26
      %p169 = scmp.eq.s32.totalorder %s168, 0
      %s171 = sadd.s32 %s170, 1
      %s172 = scalar_select %p169, %s170, %s171
      %p175 = pneg %p169
      %p176 = scmp.eq.s32.totalorder %s19, 1
      %p177 = por %p175, %p176
      %p178 = scmp.ne.s32.totalorder %s170, %s173
      %p179 = scmp.eq.s32.totalorder %s19, 0
      %p180 = por %p178, %p179
      %p181 = scmp.ne.s32.totalorder %s170, %s173
      %p182 = scmp.eq.s32.totalorder %s24, 1
      %p183 = por %p181, %p182
      %p184 = scmp.ne.s32.totalorder %s173, %s174
      %p185 = scmp.eq.s32.totalorder %s24, 0
      %p186 = por %p184, %p185
      %p187 = scmp.ne.s32.totalorder %s173, %s174
      %p188 = scmp.eq.s32.totalorder %s25, 1
      %p189 = por %p187, %p188
      %p191 = scmp.ne.s32.totalorder %s174, %s190
      %p192 = scmp.eq.s32.totalorder %s25, 0
      %p193 = por %p191, %p192
      %p194 = scmp.le.s32.totalorder 1, %s19
      %p195 = scmp.lt.s32.totalorder %s19, 3
      %p196 = pnand %p194, %p195
      %p197 = pneg %p196
      // Predicated region
      $region9: #{tpu_custom_call.1} parent=5 // pred_check
        _
      $region10: #{tpu_custom_call.1} parent=5 // pred_check_branch
        %199 = sbr.rel (%p196) target = $region12
      $region11: #{tpu_custom_call.1} parent=5 // pred_region
        %s200 = ssub.s32 %s19, 1
        // Predicated region
        $region13: #{tpu_custom_call.1} parent=11 // pred_check
          %p201 = pneg %p66
        $region14: #{tpu_custom_call.1} parent=11 // pred_check_branch
          %203 = sbr.rel (%p201) target = $region16
        $region15: #{tpu_custom_call.1} parent=11 // pred_region
          _
        $region16: #{tpu_custom_call.1} parent=11 // pred_fallthru
          _
        // Predicated region
        $region17: #{tpu_custom_call.1} parent=11 // pred_check
          %p204 = pneg %p87
        $region18: #{tpu_custom_call.1} parent=11 // pred_check_branch
          %206 = sbr.rel (%p204) target = $region20
        $region19: #{tpu_custom_call.1} parent=11 // pred_region
          _
        $region20: #{tpu_custom_call.1} parent=11 // pred_fallthru
          _
        // Predicated region
        $region21: #{tpu_custom_call.1} parent=11 // pred_check
          %p207 = pneg %p108
        $region22: #{tpu_custom_call.1} parent=11 // pred_check_branch
          %209 = sbr.rel (%p207) target = $region24
        $region23: #{tpu_custom_call.1} parent=11 // pred_region
          _
        $region24: #{tpu_custom_call.1} parent=11 // pred_fallthru
          _
      $region12: #{tpu_custom_call.1} parent=5 // pred_fallthru
        _
      %p210 = scmp.lt.s32.totalorder %s19, 2
      // Predicated region
      $region25: #{tpu_custom_call.1} parent=5 // pred_check
        %p211 = pneg %p210
      $region26: #{tpu_custom_call.1} parent=5 // pred_check_branch
        %213 = sbr.rel (%p211) target = $region28
      $region27: #{tpu_custom_call.1} parent=5 // pred_region
        // Predicated region
        $region29: #{tpu_custom_call.1} parent=27 // pred_check
          %p214 = pneg %p39
        $region30: #{tpu_custom_call.1} parent=27 // pred_check_branch
          %216 = sbr.rel (%p214) target = $region32
        $region31: #{tpu_custom_call.1} parent=27 // pred_region
          %s217 = smul.u32 16, %s19
          %p218 = scmp.lt.s32.totalorder %s217, 31
          %s219 = scalar_select %p218, %s217, 31
          %s220 = smul.addr %s219, 8
          %s221 = scalar_lea.vmem %s0, %s220
          %s222 = smul.u32 16, %s19
        $region32: #{tpu_custom_call.1} parent=27 // pred_fallthru
          _
      $region28: #{tpu_custom_call.1} parent=5 // pred_fallthru
        _
      %p223 = scmp.le.s32.totalorder 1, %s19
      %p224 = scmp.lt.s32.totalorder %s19, 3
      %p225 = pnand %p223, %p224
      %p226 = pneg %p225
      // Predicated region
      $region33: #{tpu_custom_call.1} parent=5 // pred_check
        _
      $region34: #{tpu_custom_call.1} parent=5 // pred_check_branch
        %228 = sbr.rel (%p225) target = $region36
      $region35: #{tpu_custom_call.1} parent=5 // pred_region
        %s229 = ssub.s32 %s19, 1
        %s230 = smul.u32 16, %s24
        %p231 = scmp.lt.s32.totalorder %s230, 31
        %s232 = scalar_select %p231, %s230, 31
        %s233 = smul.addr %s232, 8
        %s234 = scalar_lea.vmem %s0, %s233
        %p235 = pneg %p45
        %p236 = pneg %p42
        %p237 = pneg %p66
        %p238 = pneg %p63
        %p239 = pneg %p87
        %p240 = pneg %p84
        %p241 = pneg %p108
        %p242 = pneg %p105
        %p243 = pneg %p134
        %p244 = pneg %p131
        %s245 = sand.u32 %s121, 1
        %s246 = scalar_lea.sflag [#allocation3], %s245
        %s247 = sand.u32 %s121, 1
        %s248 = smul.addr %s247, 64
        %s249 = scalar_lea.vmem [#allocation2], %s248
        %p250 = pneg %p160
        %p251 = pneg %p157
        %s252 = smul.u32 16, %s24
        %p253 = scmp.lt.s32.totalorder %s252, 31
        %s254 = scalar_select %p253, %s252, 31
        %s255 = smul.addr %s254, 8
        %s256 = scalar_lea.vmem %s5, %s255
        %p257 = pneg %p186
        %p258 = pneg %p183
        %s259 = sand.u32 %s173, 1
        %s260 = scalar_lea.sflag [#allocation5], %s259
        %s261 = sand.u32 %s173, 1
        %s262 = smul.addr %s261, 4
        %s263 = scalar_lea.vmem [#allocation4], %s262
        %s264 = smul.u32 16, %s24
        %p265 = scmp.lt.s32.totalorder %s264, 31
        %s266 = scalar_select %p265, %s264, 31
        %s267 = smul.addr %s266, 8
        %s268 = scalar_lea.vmem %s0, %s267
        %s269 = smul.u32 16, %s24
        %s270 = smul.u32 16, %s24
        %s271 = smul.u32 16, %s24
        %p272 = scmp.lt.s32.totalorder %s271, 31
        %s273 = scalar_select %p272, %s271, 31
        %s274 = smul.addr %s273, 8
        %s275 = scalar_lea.vmem %s5, %s274
        %s276 = smul.u32 16, %s24
        %v278 = vld [vmem:[%s268] sm:$0xff]
        %v279 = vld [vmem:[%s268 + $0x8] sm:$0xff]
        %v280 = vld [vmem:[%s268 + $0x10] sm:$0xff]
        %v281 = vld [vmem:[%s268 + $0x18] sm:$0xff]
        %v282 = vld [vmem:[%s268 + $0x20] sm:$0xff]
        %v283 = vld [vmem:[%s268 + $0x28] sm:$0xff]
        %v284 = vld [vmem:[%s268 + $0x30] sm:$0xff]
        %v285 = vld [vmem:[%s268 + $0x38] sm:$0xff]
        %v286 = vld [vmem:[%s268 + $0x40] sm:$0xff]
        %v287 = vld [vmem:[%s268 + $0x48] sm:$0xff]
        %v288 = vld [vmem:[%s268 + $0x50] sm:$0xff]
        %v289 = vld [vmem:[%s268 + $0x58] sm:$0xff]
        %v290 = vld [vmem:[%s268 + $0x60] sm:$0xff]
        %v291 = vld [vmem:[%s268 + $0x68] sm:$0xff]
        %v292 = vld [vmem:[%s268 + $0x70] sm:$0xff]
        %v293 = vld [vmem:[%s268 + $0x78] sm:$0xff]
        %v294 = vpack.c.bf16 %v279, %v278
        %v295 = vpack.c.bf16 %v281, %v280
        %v296 = vpack.c.bf16 %v283, %v282
        %v297 = vpack.c.bf16 %v285, %v284
        %v298 = vpack.c.bf16 %v287, %v286
        %v299 = vpack.c.bf16 %v289, %v288
        %v300 = vpack.c.bf16 %v291, %v290
        %v301 = vpack.c.bf16 %v293, %v292
        %v302 = vld [vmem:[%s1] sm:$0xf]
        %v303 = vld [vmem:[%s1 + $0x4] sm:$0xf]
        %v306 = vunpack.c.l.b16 %v302
        %v307 = vunpack.c.l.b16 %v303
        %v308 = vpack.c.b16 %v307, %v306
        %vm310 = vcmask 130048
        %v312 = vsel %vm310, %v294, 0
        %v315 = vsel %vm310, %v295, 0
        %v318 = vsel %vm310, %v296, 0
        %v321 = vsel %vm310, %v297, 0
        %v324 = vsel %vm310, %v298, 0
        %v327 = vsel %vm310, %v299, 0
        %v330 = vsel %vm310, %v300, 0
        %v333 = vsel %vm310, %v301, 0
        %335 = vmatprep.subr.bf16.mxu0 0
        %336 = vmatpush1.bf16.msra.mxu0 0
        %337 = vmatprep.subr.bf16.mxu0 0
        %338 = vmatpush1.bf16.msra.mxu0 0
        %339 = vmatprep.subr.bf16.mxu0 0
        %340 = vmatpush1.bf16.msra.mxu0 0
        %341 = vmatprep.subr.bf16.mxu0 0
        %342 = vmatpush1.bf16.msra.mxu0 0
        %343 = vmatprep.subr.bf16.mxu0 0
        %344 = vmatpush1.bf16.msra.mxu0 0
        %345 = vmatprep.subr.bf16.mxu0 0
        %346 = vmatpush1.bf16.msra.mxu0 0
        %347 = vmatprep.subr.bf16.mxu0 0
        %348 = vmatpush1.bf16.msra.mxu0 0
        %349 = vmatprep.subr.bf16.mxu0 0
        %350 = vmatpush1.bf16.msra.mxu0 %v308
        %351 = vmatprep.subr.bf16.mxu0 0
        %352 = vmatpush2.bf16.msra.mxu0 0
        %353 = vmatprep.subr.bf16.mxu0 0
        %354 = vmatpush2.bf16.msra.mxu0 0
        %355 = vmatprep.subr.bf16.mxu0 0
        %356 = vmatpush2.bf16.msra.mxu0 0
        %357 = vmatprep.subr.bf16.mxu0 0
        %358 = vmatpush2.bf16.msra.mxu0 0
        %359 = vmatprep.subr.bf16.mxu0 0
        %360 = vmatpush2.bf16.msra.mxu0 0
        %361 = vmatprep.subr.bf16.mxu0 0
        %362 = vmatpush2.bf16.msra.mxu0 0
        %363 = vmatprep.subr.bf16.mxu0 0
        %364 = vmatpush2.bf16.msra.mxu0 0
        %365 = vmatprep.subr.bf16.mxu0 0
        %366 = vmatpush2.bf16.msra.mxu0 0
        %367 = vmatprep.mubr.bf16.mxu0 0
        %368 = vmatmul.mubr.bf16.gmra.mxu0 %v312
        %v369 = vpop.f32.mrf.mxu0
        %v370 = vadd.f32 0.0, %v369
        %v371 = vpop.f32.mrf.mxu0
        %v372 = vpop.f32.mrf.mxu0
        %v373 = vadd.f32 0.0, %v372
        %v374 = vpop.f32.mrf.mxu0
        %375 = vmatprep.mubr.bf16.mxu0 0
        %376 = vmatmul.mubr.bf16.gmra.mxu0 %v315
        %v377 = vpop.f32.mrf.mxu0
        %v378 = vadd.f32 0.0, %v377
        %v379 = vpop.f32.mrf.mxu0
        %v380 = vpop.f32.mrf.mxu0
        %v381 = vadd.f32 0.0, %v380
        %v382 = vpop.f32.mrf.mxu0
        %383 = vmatprep.mubr.bf16.mxu0 0
        %384 = vmatmul.mubr.bf16.gmra.mxu0 %v318
        %v385 = vpop.f32.mrf.mxu0
        %v386 = vadd.f32 0.0, %v385
        %v387 = vpop.f32.mrf.mxu0
        %v388 = vpop.f32.mrf.mxu0
        %v389 = vadd.f32 0.0, %v388
        %v390 = vpop.f32.mrf.mxu0
        %391 = vmatprep.mubr.bf16.mxu0 0
        %392 = vmatmul.mubr.bf16.gmra.mxu0 %v321
        %v393 = vpop.f32.mrf.mxu0
        %v394 = vadd.f32 0.0, %v393
        %v395 = vpop.f32.mrf.mxu0
        %v396 = vpop.f32.mrf.mxu0
        %v397 = vadd.f32 0.0, %v396
        %v398 = vpop.f32.mrf.mxu0
        %399 = vmatprep.mubr.bf16.mxu0 0
        %400 = vmatmul.mubr.bf16.gmra.mxu0 %v324
        %v401 = vpop.f32.mrf.mxu0
        %v402 = vadd.f32 0.0, %v401
        %v403 = vpop.f32.mrf.mxu0
        %v404 = vpop.f32.mrf.mxu0
        %v405 = vadd.f32 0.0, %v404
        %v406 = vpop.f32.mrf.mxu0
        %407 = vmatprep.mubr.bf16.mxu0 0
        %408 = vmatmul.mubr.bf16.gmra.mxu0 %v327
        %v409 = vpop.f32.mrf.mxu0
        %v410 = vadd.f32 0.0, %v409
        %v411 = vpop.f32.mrf.mxu0
        %v412 = vpop.f32.mrf.mxu0
        %v413 = vadd.f32 0.0, %v412
        %v414 = vpop.f32.mrf.mxu0
        %415 = vmatprep.mubr.bf16.mxu0 0
        %416 = vmatmul.mubr.bf16.gmra.mxu0 %v330
        %v417 = vpop.f32.mrf.mxu0
        %v418 = vadd.f32 0.0, %v417
        %v419 = vpop.f32.mrf.mxu0
        %v420 = vpop.f32.mrf.mxu0
        %v421 = vadd.f32 0.0, %v420
        %v422 = vpop.f32.mrf.mxu0
        %423 = vmatprep.mubr.bf16.mxu0 0
        %424 = vmatmul.mubr.bf16.gmra.mxu0 %v333
        %v425 = vpop.f32.mrf.mxu0
        %v426 = vadd.f32 0.0, %v425
        %v427 = vpop.f32.mrf.mxu0
        %v428 = vpop.f32.mrf.mxu0
        %v429 = vadd.f32 0.0, %v428
        %v430 = vpop.f32.mrf.mxu0
        %431 = vdwg.mxu0
        %v432 = vpack.c.bf16 %v373, %v370
        %v433 = vpack.c.bf16 %v381, %v378
        %v434 = vpack.c.bf16 %v389, %v386
        %v435 = vpack.c.bf16 %v397, %v394
        %v436 = vpack.c.bf16 %v405, %v402
        %v437 = vpack.c.bf16 %v413, %v410
        %v438 = vpack.c.bf16 %v421, %v418
        %v439 = vpack.c.bf16 %v429, %v426
        %v448 = vunpack.c.l.b16 %v432
        %v449 = vunpack.c.h.b16 %v432
        %v450 = vunpack.c.l.b16 %v433
        %v451 = vunpack.c.h.b16 %v433
        %v452 = vunpack.c.l.b16 %v434
        %v453 = vunpack.c.h.b16 %v434
        %v454 = vunpack.c.l.b16 %v435
        %v455 = vunpack.c.h.b16 %v435
        %v456 = vunpack.c.l.b16 %v436
        %v457 = vunpack.c.h.b16 %v436
        %v458 = vunpack.c.l.b16 %v437
        %v459 = vunpack.c.h.b16 %v437
        %v460 = vunpack.c.l.b16 %v438
        %v461 = vunpack.c.h.b16 %v438
        %v462 = vunpack.c.l.b16 %v439
        %v463 = vunpack.c.h.b16 %v439
        %v464 = vpack.c.b16 %v448, %v448
        %v465 = vpack.c.b16 %v449, %v449
        %v466 = vpack.c.b16 %v450, %v450
        %v467 = vpack.c.b16 %v451, %v451
        %v468 = vpack.c.b16 %v452, %v452
        %v469 = vpack.c.b16 %v453, %v453
        %v470 = vpack.c.b16 %v454, %v454
        %v471 = vpack.c.b16 %v455, %v455
        %v472 = vpack.c.b16 %v456, %v456
        %v473 = vpack.c.b16 %v457, %v457
        %v474 = vpack.c.b16 %v458, %v458
        %v475 = vpack.c.b16 %v459, %v459
        %v476 = vpack.c.b16 %v460, %v460
        %v477 = vpack.c.b16 %v461, %v461
        %v478 = vpack.c.b16 %v462, %v462
        %v479 = vpack.c.b16 %v463, %v463
        %496 = vst [vmem:[%s249] sm:$0xf] %v464
        %497 = vst [vmem:[%s249 + $0x4] sm:$0xf] %v465
        %498 = vst [vmem:[%s249 + $0x8] sm:$0xf] %v466
        %499 = vst [vmem:[%s249 + $0xc] sm:$0xf] %v467
        %500 = vst [vmem:[%s249 + $0x10] sm:$0xf] %v468
        %501 = vst [vmem:[%s249 + $0x14] sm:$0xf] %v469
        %502 = vst [vmem:[%s249 + $0x18] sm:$0xf] %v470
        %503 = vst [vmem:[%s249 + $0x1c] sm:$0xf] %v471
        %504 = vst [vmem:[%s249 + $0x20] sm:$0xf] %v472
        %505 = vst [vmem:[%s249 + $0x24] sm:$0xf] %v473
        %506 = vst [vmem:[%s249 + $0x28] sm:$0xf] %v474
        %507 = vst [vmem:[%s249 + $0x2c] sm:$0xf] %v475
        %508 = vst [vmem:[%s249 + $0x30] sm:$0xf] %v476
        %509 = vst [vmem:[%s249 + $0x34] sm:$0xf] %v477
        %510 = vst [vmem:[%s249 + $0x38] sm:$0xf] %v478
        %511 = vst [vmem:[%s249 + $0x3c] sm:$0xf] %v479
        %v512 = vld [vmem:[%s3] sm:$0xf]
        %v513 = vld [vmem:[%s3 + $0x4] sm:$0xf]
        %v514 = vld [vmem:[%s3 + $0x8] sm:$0xf]
        %v515 = vld [vmem:[%s3 + $0xc] sm:$0xf]
        %v516 = vld [vmem:[%s3 + $0x10] sm:$0xf]
        %v517 = vld [vmem:[%s3 + $0x14] sm:$0xf]
        %v518 = vld [vmem:[%s3 + $0x18] sm:$0xf]
        %v519 = vld [vmem:[%s3 + $0x1c] sm:$0xf]
        %v520 = vld [vmem:[%s3 + $0x20] sm:$0xf]
        %v521 = vld [vmem:[%s3 + $0x24] sm:$0xf]
        %v522 = vld [vmem:[%s3 + $0x28] sm:$0xf]
        %v523 = vld [vmem:[%s3 + $0x2c] sm:$0xf]
        %v524 = vld [vmem:[%s3 + $0x30] sm:$0xf]
        %v525 = vld [vmem:[%s3 + $0x34] sm:$0xf]
        %v526 = vld [vmem:[%s3 + $0x38] sm:$0xf]
        %v527 = vld [vmem:[%s3 + $0x3c] sm:$0xf]
        %v544 = vunpack.c.l.b16 %v512
        %v545 = vunpack.c.l.b16 %v513
        %v546 = vunpack.c.l.b16 %v514
        %v547 = vunpack.c.l.b16 %v515
        %v548 = vunpack.c.l.b16 %v516
        %v549 = vunpack.c.l.b16 %v517
        %v550 = vunpack.c.l.b16 %v518
        %v551 = vunpack.c.l.b16 %v519
        %v552 = vunpack.c.l.b16 %v520
        %v553 = vunpack.c.l.b16 %v521
        %v554 = vunpack.c.l.b16 %v522
        %v555 = vunpack.c.l.b16 %v523
        %v556 = vunpack.c.l.b16 %v524
        %v557 = vunpack.c.l.b16 %v525
        %v558 = vunpack.c.l.b16 %v526
        %v559 = vunpack.c.l.b16 %v527
        %v560 = vpack.c.b16 %v545, %v544
        %v561 = vpack.c.b16 %v547, %v546
        %v562 = vpack.c.b16 %v549, %v548
        %v563 = vpack.c.b16 %v551, %v550
        %v564 = vpack.c.b16 %v553, %v552
        %v565 = vpack.c.b16 %v555, %v554
        %v566 = vpack.c.b16 %v557, %v556
        %v567 = vpack.c.b16 %v559, %v558
        %576 = vmatprep.subr.bf16.mxu0 0
        %577 = vmatpush1.bf16.msra.mxu0 %v567
        %578 = vmatprep.subr.bf16.mxu0 0
        %579 = vmatpush1.bf16.msra.mxu0 %v566
        %580 = vmatprep.subr.bf16.mxu0 0
        %581 = vmatpush1.bf16.msra.mxu0 %v565
        %582 = vmatprep.subr.bf16.mxu0 0
        %583 = vmatpush1.bf16.msra.mxu0 %v564
        %584 = vmatprep.subr.bf16.mxu0 0
        %585 = vmatpush1.bf16.msra.mxu0 %v563
        %586 = vmatprep.subr.bf16.mxu0 0
        %587 = vmatpush1.bf16.msra.mxu0 %v562
        %588 = vmatprep.subr.bf16.mxu0 0
        %589 = vmatpush1.bf16.msra.mxu0 %v561
        %590 = vmatprep.subr.bf16.mxu0 0
        %591 = vmatpush1.bf16.msra.mxu0 %v560
        %592 = vmatprep.subr.bf16.mxu0 0
        %593 = vmatpush2.bf16.msra.mxu0 0
        %594 = vmatprep.subr.bf16.mxu0 0
        %595 = vmatpush2.bf16.msra.mxu0 0
        %596 = vmatprep.subr.bf16.mxu0 0
        %597 = vmatpush2.bf16.msra.mxu0 0
        %598 = vmatprep.subr.bf16.mxu0 0
        %599 = vmatpush2.bf16.msra.mxu0 0
        %600 = vmatprep.subr.bf16.mxu0 0
        %601 = vmatpush2.bf16.msra.mxu0 0
        %602 = vmatprep.subr.bf16.mxu0 0
        %603 = vmatpush2.bf16.msra.mxu0 0
        %604 = vmatprep.subr.bf16.mxu0 0
        %605 = vmatpush2.bf16.msra.mxu0 0
        %606 = vmatprep.subr.bf16.mxu0 0
        %607 = vmatpush2.bf16.msra.mxu0 0
        %608 = vmatprep.mubr.bf16.mxu0 0
        %609 = vmatmul.mubr.bf16.gmra.mxu0 %v432
        %v610 = vpop.f32.mrf.mxu0
        %v611 = vadd.f32 0.0, %v610
        %v612 = vpop.f32.mrf.mxu0
        %v613 = vpop.f32.mrf.mxu0
        %v614 = vadd.f32 0.0, %v613
        %v615 = vpop.f32.mrf.mxu0
        %616 = vmatprep.mubr.bf16.mxu0 0
        %617 = vmatmul.mubr.bf16.gmra.mxu0 %v433
        %v618 = vpop.f32.mrf.mxu0
        %v619 = vadd.f32 0.0, %v618
        %v620 = vpop.f32.mrf.mxu0
        %v621 = vpop.f32.mrf.mxu0
        %v622 = vadd.f32 0.0, %v621
        %v623 = vpop.f32.mrf.mxu0
        %624 = vmatprep.mubr.bf16.mxu0 0
        %625 = vmatmul.mubr.bf16.gmra.mxu0 %v434
        %v626 = vpop.f32.mrf.mxu0
        %v627 = vadd.f32 0.0, %v626
        %v628 = vpop.f32.mrf.mxu0
        %v629 = vpop.f32.mrf.mxu0
        %v630 = vadd.f32 0.0, %v629
        %v631 = vpop.f32.mrf.mxu0
        %632 = vmatprep.mubr.bf16.mxu0 0
        %633 = vmatmul.mubr.bf16.gmra.mxu0 %v435
        %v634 = vpop.f32.mrf.mxu0
        %v635 = vadd.f32 0.0, %v634
        %v636 = vpop.f32.mrf.mxu0
        %v637 = vpop.f32.mrf.mxu0
        %v638 = vadd.f32 0.0, %v637
        %v639 = vpop.f32.mrf.mxu0
        %640 = vmatprep.mubr.bf16.mxu0 0
        %641 = vmatmul.mubr.bf16.gmra.mxu0 %v436
        %v642 = vpop.f32.mrf.mxu0
        %v643 = vadd.f32 0.0, %v642
        %v644 = vpop.f32.mrf.mxu0
        %v645 = vpop.f32.mrf.mxu0
        %v646 = vadd.f32 0.0, %v645
        %v647 = vpop.f32.mrf.mxu0
        %648 = vmatprep.mubr.bf16.mxu0 0
        %649 = vmatmul.mubr.bf16.gmra.mxu0 %v437
        %v650 = vpop.f32.mrf.mxu0
        %v651 = vadd.f32 0.0, %v650
        %v652 = vpop.f32.mrf.mxu0
        %v653 = vpop.f32.mrf.mxu0
        %v654 = vadd.f32 0.0, %v653
        %v655 = vpop.f32.mrf.mxu0
        %656 = vmatprep.mubr.bf16.mxu0 0
        %657 = vmatmul.mubr.bf16.gmra.mxu0 %v438
        %v658 = vpop.f32.mrf.mxu0
        %v659 = vadd.f32 0.0, %v658
        %v660 = vpop.f32.mrf.mxu0
        %v661 = vpop.f32.mrf.mxu0
        %v662 = vadd.f32 0.0, %v661
        %v663 = vpop.f32.mrf.mxu0
        %664 = vmatprep.mubr.bf16.mxu0 0
        %665 = vmatmul.mubr.bf16.gmra.mxu0 %v439
        %v666 = vpop.f32.mrf.mxu0
        %v667 = vadd.f32 0.0, %v666
        %v668 = vpop.f32.mrf.mxu0
        %v669 = vpop.f32.mrf.mxu0
        %v670 = vadd.f32 0.0, %v669
        %v671 = vpop.f32.mrf.mxu0
        %672 = vdwg.mxu0
        %vm673 = vcmask 31744
        %674 = vst.msk [vmem:[%s275] sm:$0xff] %vm673, %v611
        %675 = vst.msk [vmem:[%s275 + $0x8] sm:$0xff] %vm673, %v614
        %676 = vst.msk [vmem:[%s275 + $0x10] sm:$0xff] %vm673, %v619
        %677 = vst.msk [vmem:[%s275 + $0x18] sm:$0xff] %vm673, %v622
        %678 = vst.msk [vmem:[%s275 + $0x20] sm:$0xff] %vm673, %v627
        %679 = vst.msk [vmem:[%s275 + $0x28] sm:$0xff] %vm673, %v630
        %680 = vst.msk [vmem:[%s275 + $0x30] sm:$0xff] %vm673, %v635
        %681 = vst.msk [vmem:[%s275 + $0x38] sm:$0xff] %vm673, %v638
        %682 = vst.msk [vmem:[%s275 + $0x40] sm:$0xff] %vm673, %v643
        %683 = vst.msk [vmem:[%s275 + $0x48] sm:$0xff] %vm673, %v646
        %684 = vst.msk [vmem:[%s275 + $0x50] sm:$0xff] %vm673, %v651
        %685 = vst.msk [vmem:[%s275 + $0x58] sm:$0xff] %vm673, %v654
        %686 = vst.msk [vmem:[%s275 + $0x60] sm:$0xff] %vm673, %v659
        %687 = vst.msk [vmem:[%s275 + $0x68] sm:$0xff] %vm673, %v662
        %688 = vst.msk [vmem:[%s275 + $0x70] sm:$0xff] %vm673, %v667
        %689 = vst.msk [vmem:[%s275 + $0x78] sm:$0xff] %vm673, %v670
        %v690 = vld [vmem:[%s2] sm:$0x3]
        %691 = vmatprep.subr.bf16.mxu0 0
        %692 = vmatpush1.bf16.xpose.msra.mxu0 %v439
        %693 = vmatprep.subr.bf16.mxu0 0
        %694 = vmatpush1.bf16.xpose.msra.mxu0 %v438
        %695 = vmatprep.subr.bf16.mxu0 0
        %696 = vmatpush1.bf16.xpose.msra.mxu0 %v437
        %697 = vmatprep.subr.bf16.mxu0 0
        %698 = vmatpush1.bf16.xpose.msra.mxu0 %v436
        %699 = vmatprep.subr.bf16.mxu0 0
        %700 = vmatpush1.bf16.xpose.msra.mxu0 %v435
        %701 = vmatprep.subr.bf16.mxu0 0
        %702 = vmatpush1.bf16.xpose.msra.mxu0 %v434
        %703 = vmatprep.subr.bf16.mxu0 0
        %704 = vmatpush1.bf16.xpose.msra.mxu0 %v433
        %705 = vmatprep.subr.bf16.mxu0 0
        %706 = vmatpush1.bf16.xpose.msra.mxu0 %v432
        %707 = vmatprep.subr.bf16.mxu0 0
        %708 = vmatpush2.bf16.xpose.msra.mxu0 0
        %709 = vmatprep.subr.bf16.mxu0 0
        %710 = vmatpush2.bf16.xpose.msra.mxu0 0
        %711 = vmatprep.subr.bf16.mxu0 0
        %712 = vmatpush2.bf16.xpose.msra.mxu0 0
        %713 = vmatprep.subr.bf16.mxu0 0
        %714 = vmatpush2.bf16.xpose.msra.mxu0 0
        %715 = vmatprep.subr.bf16.mxu0 0
        %716 = vmatpush2.bf16.xpose.msra.mxu0 0
        %717 = vmatprep.subr.bf16.mxu0 0
        %718 = vmatpush2.bf16.xpose.msra.mxu0 0
        %719 = vmatprep.subr.bf16.mxu0 0
        %720 = vmatpush2.bf16.xpose.msra.mxu0 0
        %721 = vmatprep.subr.bf16.mxu0 0
        %722 = vmatpush2.bf16.xpose.msra.mxu0 0
        %723 = vmatprep.mubr.bf16.mxu0 0
        %724 = vmatmul.mubr.bf16.gmra.mxu0 %v690
        %v725 = vpop.f32.mrf.mxu0
        %v726 = vadd.f32 0.0, %v725
        %v727 = vpop.f32.mrf.mxu0
        %v728 = vpop.f32.mrf.mxu0
        %v729 = vpop.f32.mrf.mxu0
        %730 = vdwg.mxu0
        %731 = vst [vmem:[%s263] sm:$0xf] %v726
        %s732 = sand.u32 %s121, 1
        %s733 = scalar_lea.sflag [#allocation3], %s732
        %s734 = sand.u32 %s121, 1
        %s735 = smul.addr %s734, 64
        %s736 = scalar_lea.vmem [#allocation2], %s735
        %s737 = smul.u32 16, %s24
        %p738 = scmp.lt.s32.totalorder %s737, 31
        %s739 = scalar_select %p738, %s737, 31
        %s740 = smul.addr %s739, 8
        %s741 = scalar_lea.vmem %s5, %s740
        %s742 = sand.u32 %s173, 1
        %s743 = scalar_lea.sflag [#allocation5], %s742
        %s744 = sand.u32 %s173, 1
        %s745 = smul.addr %s744, 4
        %s746 = scalar_lea.vmem [#allocation4], %s745
        // Predicated region
        $region37: #{tpu_custom_call.1} parent=35 // pred_check
          %p747 = pneg %p131
        $region38: #{tpu_custom_call.1} parent=35 // pred_check_branch
          %749 = sbr.rel (%p747) target = $region40
        $region39: #{tpu_custom_call.1} parent=35 // pred_region
          %s750 = smul.u32 16, %s24
          %s752 = ssub.s32 1024, 1024
          %753 = vsyncadd %s733, %s752
          %s754 = smul.addr %s750, 64
          %s755 = scalar_lea.hbm %s4, %s754
          %s756 = sshll.u32 %s736, 4
          %s757 = int_to_ptr.vmem [resolvable:$true] %s756
          %762 = dma.vmem_to_hbm [thread:$0]  %s757, 1024, %s755, %s733, 64, 64, 4
        $region40: #{tpu_custom_call.1} parent=35 // pred_fallthru
          _
        // Predicated region
        $region41: #{tpu_custom_call.1} parent=35 // pred_check
          %p763 = pneg %p157
        $region42: #{tpu_custom_call.1} parent=35 // pred_check_branch
          %765 = sbr.rel (%p763) target = $region44
        $region43: #{tpu_custom_call.1} parent=35 // pred_region
          %s766 = smul.u32 16, %s24
        $region44: #{tpu_custom_call.1} parent=35 // pred_fallthru
          _
        // Predicated region
        $region45: #{tpu_custom_call.1} parent=35 // pred_check
          %p767 = pneg %p183
        $region46: #{tpu_custom_call.1} parent=35 // pred_check_branch
          %769 = sbr.rel (%p767) target = $region48
        $region47: #{tpu_custom_call.1} parent=35 // pred_region
          %s771 = ssub.s32 64, 64
          %772 = vsyncadd %s743, %s771
          %s773 = smul.addr %s24, 64
          %s774 = scalar_lea.hbm %s6, %s773
          %s776 = sshll.u32 %s746, 4
          %s777 = int_to_ptr.vmem [resolvable:$true] %s776
          %779 = dma.vmem_to_hbm [thread:$0]  %s777, 64, %s774, %s743
        $region48: #{tpu_custom_call.1} parent=35 // pred_fallthru
          _
      $region36: #{tpu_custom_call.1} parent=5 // pred_fallthru
        _
      %p780 = scmp.le.s32.totalorder 2, %s19
      // Predicated region
      $region49: #{tpu_custom_call.1} parent=5 // pred_check
        %p781 = pneg %p780
      $region50: #{tpu_custom_call.1} parent=5 // pred_check_branch
        %783 = sbr.rel (%p781) target = $region52
      $region51: #{tpu_custom_call.1} parent=5 // pred_region
        %s784 = ssub.s32 %s19, 2
        // Predicated region
        $region53: #{tpu_custom_call.1} parent=51 // pred_check
          %p785 = pneg %p137
        $region54: #{tpu_custom_call.1} parent=51 // pred_check_branch
          %787 = sbr.rel (%p785) target = $region56
        $region55: #{tpu_custom_call.1} parent=51 // pred_region
          %s788 = sand.u32 %s122, 1
          %s789 = scalar_lea.sflag [#allocation3], %s788
          %s790 = sand.u32 %s122, 1
          %s791 = smul.addr %s790, 64
          %s792 = scalar_lea.vmem [#allocation2], %s791
          %793 = dma.done %s789, 1024
        $region56: #{tpu_custom_call.1} parent=51 // pred_fallthru
          _
        // Predicated region
        $region57: #{tpu_custom_call.1} parent=51 // pred_check
          %p794 = pneg %p163
        $region58: #{tpu_custom_call.1} parent=51 // pred_check_branch
          %796 = sbr.rel (%p794) target = $region60
        $region59: #{tpu_custom_call.1} parent=51 // pred_region
          %s797 = smul.u32 16, %s25
          %p798 = scmp.lt.s32.totalorder %s797, 31
          %s799 = scalar_select %p798, %s797, 31
          %s800 = smul.addr %s799, 8
          %s801 = scalar_lea.vmem %s5, %s800
        $region60: #{tpu_custom_call.1} parent=51 // pred_fallthru
          _
        // Predicated region
        $region61: #{tpu_custom_call.1} parent=51 // pred_check
          %p802 = pneg %p189
        $region62: #{tpu_custom_call.1} parent=51 // pred_check_branch
          %804 = sbr.rel (%p802) target = $region64
        $region63: #{tpu_custom_call.1} parent=51 // pred_region
          %s805 = sand.u32 %s174, 1
          %s806 = scalar_lea.sflag [#allocation5], %s805
          %s807 = sand.u32 %s174, 1
          %s808 = smul.addr %s807, 4
          %s809 = scalar_lea.vmem [#allocation4], %s808
          %810 = dma.done %s806, 64
        $region64: #{tpu_custom_call.1} parent=51 // pred_fallthru
          _
      $region52: #{tpu_custom_call.1} parent=5 // pred_fallthru
        _
    $region6: #{tpu_custom_call.1} parent=1 // loop_footer
      %s23 = sadd.s32 1, %s19
    $region7: #{tpu_custom_call.1} parent=1 // loop_footer_branch
      %18 = sbr.rel target = $region3
    $region8: #{tpu_custom_call.1} parent=1 // loop_exit
      _
    %811 = vsyncpa [#allocation3], 1
    %s812 = scalar_lea.sflag [#allocation3], 1
    %813 = vsyncpa %s812, 1
    %814 = vsyncpa [#allocation5], 1
    %s815 = scalar_lea.sflag [#allocation5], 1
    %816 = vsyncpa %s815, 1

</llo_original>
